<compile_context>
chip_gen: v6e
topology: v6e:2x2x1
jax: 0.10.0
libtpu: 0.0.40
codegen_flags: <defaults>
</compile_context>

<pallas_src>
import jax
import jax.numpy as jnp
from jax import lax
from jax.experimental import pallas as pl
from jax.experimental.pallas import tpu as pltpu


def _pair(x):
    if isinstance(x, (tuple, list)):
        return tuple(x)
    return (x, x)


def _round_up(x, m):
    return (x + m - 1) // m * m


def _matmul_bias_fastk_kernel(x_ref, w_ref, b_ref, o_ref):
    """Single-K-tile path: no accumulator round-trip, direct bf16 store.

    x_ref: (tm, Kp) bf16   w_ref: (Kp, tn) bf16   b_ref: (1, tn) f32
    o_ref: (tm, tn) bf16
    """
    acc = jnp.dot(x_ref[...], w_ref[...], preferred_element_type=jnp.float32)
    o_ref[...] = (acc + b_ref[...]).astype(o_ref.dtype)


def _matmul_bias_acc_kernel(x_ref, w_ref, b_ref, o_ref, acc_ref):
    """Multi-K-tile path; grid axis 2 (K) is the reduction axis.

    x_ref: (tm, tk) bf16   w_ref: (tk, tn) bf16   b_ref: (1, tn) f32
    o_ref: (tm, tn) bf16   acc_ref: (tm, tn) f32 VMEM scratch
    """
    @pl.when(pl.program_id(2) == 0)
    def _init():
        # Bias folded into the accumulator init (replaces a zeros write).
        acc_ref[...] = jnp.broadcast_to(b_ref[...], acc_ref.shape)

    acc_ref[...] += jnp.dot(x_ref[...], w_ref[...],
                            preferred_element_type=jnp.float32)

    @pl.when(pl.program_id(2) == pl.num_programs(2) - 1)
    def _done():
        o_ref[...] = acc_ref[...].astype(o_ref.dtype)


def conv2d_same(x_nchw, w_oihw, bias, stride=1, dilation=1):
    """Pallas implementation of Conv2dSame.forward (NCHW in / NCHW out)."""
    sh, sw = _pair(stride)
    dh, dw = _pair(dilation)

    N, Cin, H, W = x_nchw.shape
    Cout, Cin_w, KH, KW = w_oihw.shape
    assert Cin == Cin_w

    # Static "same" padding — identical to Conv2dSame.__init__:
    # total = dilation * (kernel - 1), independent of stride.
    total_h = dh * (KH - 1)
    total_w = dw * (KW - 1)
    pad_top, pad_bottom = total_h // 2, total_h - total_h // 2
    pad_left, pad_right = total_w // 2, total_w - total_w // 2

    Hp, Wp = H + total_h, W + total_w
    H_out = (Hp - dh * (KH - 1) - 1) // sh + 1
    W_out = (Wp - dw * (KW - 1) - 1) // sw + 1

    # ---- XLA glue: bf16 FIRST (half-width transpose/pad/im2col), then NHWC ----
    x = x_nchw.astype(jnp.bfloat16)
    x = jnp.transpose(x, (0, 2, 3, 1))
    x = jnp.pad(x, ((0, 0), (pad_top, pad_bottom), (pad_left, pad_right), (0, 0)))

    taps = []
    for kh in range(KH):
        for kw in range(KW):
            taps.append(x[:,
                          kh * dh: kh * dh + sh * (H_out - 1) + 1: sh,
                          kw * dw: kw * dw + sw * (W_out - 1) + 1: sw, :])
    # (N, H_out, W_out, KH*KW, Cin) -> (M, K), K ordered (kh, kw, cin)
    patches = jnp.stack(taps, axis=3).reshape(N * H_out * W_out, KH * KW * Cin)

    # Weights (Cout, Cin, KH, KW) -> (KH*KW*Cin, Cout), same (kh, kw, cin) order.
    w = jnp.transpose(w_oihw, (2, 3, 1, 0)).astype(jnp.bfloat16)
    w = w.reshape(KH * KW * Cin, Cout)

    M, K = patches.shape

    # ---- Tile / padding selection (lane-aligned, VMEM-budgeted for v7x) ----
    Kp = _round_up(K, 128)
    Np = _round_up(Cout, 128)
    tn = 512 if Np % 512 == 0 else (256 if Np % 256 == 0 else 128)

    tm = max(16, min(512, _round_up(M, 16)))      # bf16 packs 2 rows/sublane
    Mp = _round_up(M, tm)

    # Guarantee >= 2 parallel grid steps so both v7x TensorCores get work
    # (and the pipeline has something to overlap) even for tiny / strided M.
    while (Mp // tm) * (Np // tn) < 2 and tm > 16:
        tm = max(16, _round_up(tm // 2, 16))
        Mp = _round_up(M, tm)

    # Largest K tile whose double-buffered bf16 LHS/RHS stay well inside the
    # 48 MiB VMEM cap (cap itself fits every generation incl. v7x's 64 MiB).
    vmem_budget = 24 * 1024 * 1024
    tk = 128
    for cand in (4096, 2048, 1024, 512, 256):
        if Kp % cand == 0 and 2 * 2 * (tm * cand + cand * tn) <= vmem_budget:
            tk = cand
            break

    patches = jnp.pad(patches, ((0, Mp - M), (0, Kp - K)))
    w = jnp.pad(w, ((0, Kp - K), (0, Np - Cout)))
    b = jnp.pad(bias.astype(jnp.float32), (0, Np - Cout)).reshape(1, Np)

    grid_m, grid_n, grid_k = Mp // tm, Np // tn, Kp // tk

    cost = pl.CostEstimate(
        flops=2 * Mp * Kp * Np,
        transcendentals=0,
        bytes_accessed=(Mp * Kp + Kp * Np) * 2 + Np * 4 + Mp * Np * 2)

    if grid_k == 1:
        # Fast path: whole reduction in one MXU contraction, no f32 scratch.
        out = pl.pallas_call(
            _matmul_bias_fastk_kernel,
            out_shape=jax.ShapeDtypeStruct((Mp, Np), jnp.bfloat16),
            grid_spec=pltpu.PrefetchScalarGridSpec(
                num_scalar_prefetch=0,
                grid=(grid_m, grid_n),
                in_specs=[
                    pl.BlockSpec((tm, Kp), lambda i, j: (i, 0)),
                    pl.BlockSpec((Kp, tn), lambda i, j: (0, j)),
                    pl.BlockSpec((1, tn), lambda i, j: (0, j)),
                ],
                out_specs=pl.BlockSpec((tm, tn), lambda i, j: (i, j)),
            ),
            compiler_params=pltpu.CompilerParams(
                dimension_semantics=("parallel", "parallel"),
                vmem_limit_bytes=48 * 1024 * 1024),
            cost_estimate=cost,
        )(patches, w, b)
    else:
        out = pl.pallas_call(
            _matmul_bias_acc_kernel,
            out_shape=jax.ShapeDtypeStruct((Mp, Np), jnp.bfloat16),
            grid_spec=pltpu.PrefetchScalarGridSpec(
                num_scalar_prefetch=0,
                grid=(grid_m, grid_n, grid_k),
                in_specs=[
                    pl.BlockSpec((tm, tk), lambda i, j, k: (i, k)),
                    pl.BlockSpec((tk, tn), lambda i, j, k: (k, j)),
                    pl.BlockSpec((1, tn), lambda i, j, k: (0, j)),
                ],
                out_specs=pl.BlockSpec((tm, tn), lambda i, j, k: (i, j)),
                scratch_shapes=[pltpu.VMEM((tm, tn), jnp.float32)],
            ),
            compiler_params=pltpu.CompilerParams(
                dimension_semantics=("parallel", "parallel", "arbitrary"),
                vmem_limit_bytes=48 * 1024 * 1024),
            cost_estimate=cost,
        )(patches, w, b)

    # Un-pad, back to PyTorch's NCHW convention.
    out = out[:M, :Cout].reshape(N, H_out, W_out, Cout)
    return jnp.transpose(out, (0, 3, 1, 2))


def _reference(x_nchw, w_oihw, bias, stride=1, dilation=1):
    """Pure-JAX f32 reference mirroring Conv2dSame.forward."""
    sh, sw = _pair(stride)
    dh, dw = _pair(dilation)
    _, _, KH, KW = w_oihw.shape
    total_h = dh * (KH - 1)
    total_w = dw * (KW - 1)
    pad = ((total_h // 2, total_h - total_h // 2),
           (total_w // 2, total_w - total_w // 2))
    out = lax.conv_general_dilated(
        x_nchw.astype(jnp.float32), w_oihw.astype(jnp.float32),
        window_strides=(sh, sw), padding=pad,
        rhs_dilation=(dh, dw),
        dimension_numbers=("NCHW", "OIHW", "NCHW"),
        precision=lax.Precision.HIGHEST)
    return out + bias.reshape(1, -1, 1, 1)


if __name__ == "__main__":
    # Module config (synthetic, deterministic init):
    in_channels, out_channels, kernel_size = 4, 8, 3

    key = jax.random.PRNGKey(0)
    kx, kw, kb = jax.random.split(key, 3)

    # Input: (N, C, H, W) = (2, 4, 16, 16), PyTorch NCHW convention.
    x = jax.random.normal(kx, (2, in_channels, 16, 16), dtype=jnp.float32)
    weight = jax.random.normal(
        kw, (out_channels, in_channels, kernel_size, kernel_size),
        dtype=jnp.float32) * 0.1
    bias = jax.random.normal(kb, (out_channels,), dtype=jnp.float32) * 0.1

    # bf16 inputs / bf16 stores with f32 accumulation -> loosened tolerance
    # vs the pure-f32 reference.
    for stride, dilation in [(1, 1), (2, 1), (1, 2)]:
        out = conv2d_same(x, weight, bias, stride=stride, dilation=dilation)
        out = jax.block_until_ready(out)
        ref = _reference(x, weight, bias, stride=stride, dilation=dilation)
        assert out.shape == ref.shape, (stride, dilation, out.shape, ref.shape)
        max_err = float(jnp.max(jnp.abs(out - ref)))
        assert jnp.allclose(out, ref, atol=5e-2, rtol=5e-2), (
            stride, dilation, max_err)

    print("KERNEL_OK")
</pallas_src>

<mosaic_0001>
module attributes {stable_mosaic.version = 11 : i64} {
  func.func @_matmul_bias_fastk_kernel(%arg0: i32, %arg1: i32, %arg2: memref<256x128xbf16, #tpu.memory_space<vmem>>, %arg3: memref<128x128xbf16, #tpu.memory_space<vmem>>, %arg4: memref<1x128xf32, #tpu.memory_space<vmem>>, %arg5: memref<256x128xbf16, #tpu.memory_space<vmem>>) attributes {dimension_semantics = [#tpu.dimension_semantics<parallel>, #tpu.dimension_semantics<parallel>], iteration_bounds = array<i64: 2, 1>, scalar_prefetch = 0 : i64, scratch_operands = 0 : i64, tpu.core_type = #tpu.core_type<tc>, window_params = [{transform_indices = @transform_0, window_bounds = array<i64: 256, 128>}, {transform_indices = @transform_1, window_bounds = array<i64: 128, 128>}, {transform_indices = @transform_2, window_bounds = array<i64: 1, 128>}, {transform_indices = @transform_3, window_bounds = array<i64: 256, 128>}]} {
    %c0 = arith.constant 0 : index
    %c0_0 = arith.constant 0 : index
    %0 = vector.load %arg2[%c0, %c0_0] : memref<256x128xbf16, #tpu.memory_space<vmem>>, vector<256x128xbf16>
    %c0_1 = arith.constant 0 : index
    %c0_2 = arith.constant 0 : index
    %1 = vector.load %arg3[%c0_1, %c0_2] : memref<128x128xbf16, #tpu.memory_space<vmem>>, vector<128x128xbf16>
    %cst = arith.constant dense<0.000000e+00> : vector<256x128xf32>
    %2 = tpu.matmul %0, %1, %cst {dimension_numbers = #tpu.dot_dimension_numbers<[1], [0], [0], [1], [0, 0, 1, 1], [], []>} : vector<256x128xbf16>, vector<128x128xbf16>, vector<256x128xf32> -> vector<256x128xf32>
    %c0_3 = arith.constant 0 : index
    %c0_4 = arith.constant 0 : index
    %3 = vector.load %arg4[%c0_3, %c0_4] : memref<1x128xf32, #tpu.memory_space<vmem>>, vector<1x128xf32>
    %4 = vector.broadcast %3 : vector<1x128xf32> to vector<256x128xf32>
    %5 = arith.addf %2, %4 : vector<256x128xf32>
    %6 = arith.truncf %5 : vector<256x128xf32> to vector<256x128xbf16>
    %c0_5 = arith.constant 0 : index
    %c0_6 = arith.constant 0 : index
    %7 = vector.load %arg5[%c0_5, %c0_6] : memref<256x128xbf16, #tpu.memory_space<vmem>>, vector<256x128xbf16>
    tpu.vector_store %arg5[%c0_5, %c0_6], %6 {strides = array<i32>} : memref<256x128xbf16, #tpu.memory_space<vmem>>, vector<256x128xbf16>,
    return
  }
  func.func @transform_0(%arg0: i32, %arg1: i32) -> (i32, i32) {
    %c0_i32 = arith.constant 0 : i32
    %c0_i32_0 = arith.constant 0 : i32
    return %arg0, %c0_i32 : i32, i32
  }
  func.func @transform_1(%arg0: i32, %arg1: i32) -> (i32, i32) {
    %c0_i32 = arith.constant 0 : i32
    %c0_i32_0 = arith.constant 0 : i32
    return %c0_i32, %arg1 : i32, i32
  }
  func.func @transform_2(%arg0: i32, %arg1: i32) -> (i32, i32) {
    %c0_i32 = arith.constant 0 : i32
    %c0_i32_0 = arith.constant 0 : i32
    return %c0_i32, %arg1 : i32, i32
  }
  func.func @transform_3(%arg0: i32, %arg1: i32) -> (i32, i32) {
    %c0_i32 = arith.constant 0 : i32
    return %arg0, %arg1 : i32, i32
  }
}

</mosaic_0001>

<llo_original>
// kernel: tpu_custom_call.1
$region0: #{tpu_custom_call.1}
  #allocation0 [shape = 'u32[]', space=smem, size = 0x4, offset = 0x4, fixed_abs, tag = 'smem constant byte address 0x4 - core index']
  #allocation1 [shape = 'u32[144,128]{1,0:T(1,128)}', space=vmem, size = 0x12000, scoped, tag = 'internal scratch']
  %s0 = inlined_call_operand.hbm [shape: bf16[512,128], index: 0, kind: input, shape index: {}]
  %s1 = inlined_call_operand.hbm [shape: bf16[128,128], index: 1, kind: input, shape index: {}]
  %s2 = inlined_call_operand.vmem [shape: f32[1,128], index: 2, kind: input, shape index: {}]
  %s3 = inlined_call_operand.hbm [shape: bf16[512,128], index: 3, kind: output, shape index: {}]
  %s4 = sld [smem:[#allocation0]]
  $region53: #{tpu_custom_call.1} parent=0
    _
  %s6 = ssub.s32 1, %s4
  %s7 = scalar_select 0, %s6, %s4
  $region1: #{tpu_custom_call.1} parent=0
    #allocation2 [shape = 'u8[131072]{0}', space=vmem, size = 0x20000, scoped, tag = 'input window, operand 0']
    #allocation3 [shape = 's32[2]{0}', space=sflag, size = 0x8, scoped, tag = 'scoped memory for tpu_custom_call.1']
    #allocation4 [shape = 's32[2]{0}', space=sflag, size = 0x8, scoped, tag = 'scoped memory for tpu_custom_call.1']
    #allocation5 [shape = 'u8[32768]{0}', space=vmem, size = 0x8000, scoped, tag = 'input window, operand 1, single buffered']
    #allocation6 [shape = 's32[1]{0}', space=sflag, size = 0x4, scoped, tag = 'scoped memory for tpu_custom_call.1']
    #allocation7 [shape = 'u8[131072]{0}', space=vmem, size = 0x20000, scoped, tag = 'output window, operand 0']
    %8 = vsyncpa [#allocation3], 0
    %s9 = scalar_lea.sflag [#allocation3], 1
    %10 = vsyncpa %s9, 0
    %11 = vsyncpa [#allocation6], 0
    %12 = vsyncpa [#allocation4], 0
    %s13 = scalar_lea.sflag [#allocation4], 1
    %14 = vsyncpa %s13, 0
    loop: start=0, step=1, limit=4
    $region2: #{tpu_custom_call.1} parent=1 // loop_pre_header
      _
    $region3: #{tpu_custom_call.1} parent=1 // loop_header
      %s16 = sphi 0, %s20
      %p17 = scmp.ge.s32.totalorder %s16, 4
      %s23 = sphi 0, %s35
      %s24 = sphi 0, %s31
      %s25 = sphi 0, %s23
      %s26 = sphi 0, %s24
      %s27 = sphi 0, %s25
      %s28 = sphi 0, %s26
      %s38 = sphi 0, %s40
      %s41 = sphi 0, %s38
      %s42 = sphi 0, %s41
      %s58 = sphi 0, %s42
      %s64 = sphi 0, %s66
      %s67 = sphi 0, %s64
      %s68 = sphi 0, %s67
      %s84 = sphi 0, %s68
      %s90 = sphi 0, %s92
      %s93 = sphi 0, %s90
      %s94 = sphi 0, %s93
      %s110 = sphi 0, %s94
      %s118 = sphi 0, %s120
      %s121 = sphi 0, %s118
      %s122 = sphi 0, %s121
      %s138 = sphi 0, %s122
    $region4: #{tpu_custom_call.1} parent=1 // loop_header_branch
      %19 = sbr.rel (%p17) target = $region8
    $region5: #{tpu_custom_call.1} parent=1 // loop_body
      %s21 = ssub.s32 %s16, 1
      %s22 = ssub.s32 %s16, 2
      %s29 = sadd.s32 1, %s24
      %p30 = scmp.ge.s32.totalorder %s29, 1
      %s31 = scalar_select %p30, 0, %s29
      %s32 = sadd.s32 1, %s23
      %s33 = scalar_select %p30, %s32, %s23
      %p34 = scmp.ge.s32.totalorder %s33, 2
      %s35 = scalar_select %p34, 0, %s33
      %s36 = ssub.s32 %s23, %s35
      %p37 = scmp.eq.s32.totalorder %s36, 0
      %s39 = sadd.s32 %s38, 1
      %s40 = scalar_select %p37, %s38, %s39
      %p43 = pneg %p37
      %p44 = scmp.eq.s32.totalorder %s16, 1
      %p45 = por %p43, %p44
      %p46 = scmp.ne.s32.totalorder %s38, %s41
      %p47 = scmp.eq.s32.totalorder %s16, 0
      %p48 = por %p46, %p47
      %p49 = scmp.ne.s32.totalorder %s38, %s41
      %p50 = scmp.eq.s32.totalorder %s21, 1
      %p51 = por %p49, %p50
      %p52 = scmp.ne.s32.totalorder %s41, %s42
      %p53 = scmp.eq.s32.totalorder %s21, 0
      %p54 = por %p52, %p53
      %p55 = scmp.ne.s32.totalorder %s41, %s42
      %p56 = scmp.eq.s32.totalorder %s22, 1
      %p57 = por %p55, %p56
      %p59 = scmp.ne.s32.totalorder %s42, %s58
      %p60 = scmp.eq.s32.totalorder %s22, 0
      %p61 = por %p59, %p60
      %s62 = ssub.s32 %s24, %s31
      %p63 = scmp.eq.s32.totalorder %s62, 0
      %s65 = sadd.s32 %s64, 1
      %s66 = scalar_select %p63, %s64, %s65
      %p69 = pneg %p63
      %p70 = scmp.eq.s32.totalorder %s16, 1
      %p71 = por %p69, %p70
      %p72 = scmp.ne.s32.totalorder %s64, %s67
      %p73 = scmp.eq.s32.totalorder %s16, 0
      %p74 = por %p72, %p73
      %p75 = scmp.ne.s32.totalorder %s64, %s67
      %p76 = scmp.eq.s32.totalorder %s21, 1
      %p77 = por %p75, %p76
      %p78 = scmp.ne.s32.totalorder %s67, %s68
      %p79 = scmp.eq.s32.totalorder %s21, 0
      %p80 = por %p78, %p79
      %p81 = scmp.ne.s32.totalorder %s67, %s68
      %p82 = scmp.eq.s32.totalorder %s22, 1
      %p83 = por %p81, %p82
      %p85 = scmp.ne.s32.totalorder %s68, %s84
      %p86 = scmp.eq.s32.totalorder %s22, 0
      %p87 = por %p85, %p86
      %s88 = ssub.s32 %s24, %s31
      %p89 = scmp.eq.s32.totalorder %s88, 0
      %s91 = sadd.s32 %s90, 1
      %s92 = scalar_select %p89, %s90, %s91
      %p95 = pneg %p89
      %p96 = scmp.eq.s32.totalorder %s16, 1
      %p97 = por %p95, %p96
      %p98 = scmp.ne.s32.totalorder %s90, %s93
      %p99 = scmp.eq.s32.totalorder %s16, 0
      %p100 = por %p98, %p99
      %p101 = scmp.ne.s32.totalorder %s90, %s93
      %p102 = scmp.eq.s32.totalorder %s21, 1
      %p103 = por %p101, %p102
      %p104 = scmp.ne.s32.totalorder %s93, %s94
      %p105 = scmp.eq.s32.totalorder %s21, 0
      %p106 = por %p104, %p105
      %p107 = scmp.ne.s32.totalorder %s93, %s94
      %p108 = scmp.eq.s32.totalorder %s22, 1
      %p109 = por %p107, %p108
      %p111 = scmp.ne.s32.totalorder %s94, %s110
      %p112 = scmp.eq.s32.totalorder %s22, 0
      %p113 = por %p111, %p112
      %s114 = ssub.s32 %s23, %s35
      %s115 = ssub.s32 %s24, %s31
      %s116 = sor.u32 %s114, %s115
      %p117 = scmp.eq.s32.totalorder %s116, 0
      %s119 = sadd.s32 %s118, 1
      %s120 = scalar_select %p117, %s118, %s119
      %p123 = pneg %p117
      %p124 = scmp.eq.s32.totalorder %s16, 1
      %p125 = por %p123, %p124
      %p126 = scmp.ne.s32.totalorder %s118, %s121
      %p127 = scmp.eq.s32.totalorder %s16, 0
      %p128 = por %p126, %p127
      %p129 = scmp.ne.s32.totalorder %s118, %s121
      %p130 = scmp.eq.s32.totalorder %s21, 1
      %p131 = por %p129, %p130
      %p132 = scmp.ne.s32.totalorder %s121, %s122
      %p133 = scmp.eq.s32.totalorder %s21, 0
      %p134 = por %p132, %p133
      %p135 = scmp.ne.s32.totalorder %s121, %s122
      %p136 = scmp.eq.s32.totalorder %s22, 1
      %p137 = por %p135, %p136
      %p139 = scmp.ne.s32.totalorder %s122, %s138
      %p140 = scmp.eq.s32.totalorder %s22, 0
      %p141 = por %p139, %p140
      %p142 = scmp.le.s32.totalorder 1, %s16
      %p143 = scmp.lt.s32.totalorder %s16, 3
      %p144 = pnand %p142, %p143
      %p145 = pneg %p144
      // Predicated region
      $region9: #{tpu_custom_call.1} parent=5 // pred_check
        _
      $region10: #{tpu_custom_call.1} parent=5 // pred_check_branch
        %147 = sbr.rel (%p144) target = $region12
      $region11: #{tpu_custom_call.1} parent=5 // pred_region
        %s148 = ssub.s32 %s16, 1
        // Predicated region
        $region13: #{tpu_custom_call.1} parent=11 // pred_check
          %p149 = pneg %p80
        $region14: #{tpu_custom_call.1} parent=11 // pred_check_branch
          %151 = sbr.rel (%p149) target = $region16
        $region15: #{tpu_custom_call.1} parent=11 // pred_region
          %s153 = ssub.s32 1024, 1024
          %154 = vsyncadd [#allocation6], %s153
          %s155 = smul.addr %s26, 64
          %s156 = scalar_lea.hbm %s1, %s155
          %s157 = sshll.u32 [#allocation5], 4
          %s158 = int_to_ptr.vmem [resolvable:$true] %s157
          %163 = dma.hbm_to_vmem [thread:$0]  %s156, 1024, %s158, [#allocation6], 64, 64, 4
        $region16: #{tpu_custom_call.1} parent=11 // pred_fallthru
          _
        // Predicated region
        $region17: #{tpu_custom_call.1} parent=11 // pred_check
          %p164 = pneg %p106
        $region18: #{tpu_custom_call.1} parent=11 // pred_check_branch
          %166 = sbr.rel (%p164) target = $region20
        $region19: #{tpu_custom_call.1} parent=11 // pred_region
          %p167 = scmp.lt.s32.totalorder %s26, 0
          %s168 = scalar_select %p167, %s26, 0
          %s169 = scalar_lea.vmem %s2, %s168
        $region20: #{tpu_custom_call.1} parent=11 // pred_fallthru
          _
      $region12: #{tpu_custom_call.1} parent=5 // pred_fallthru
        _
      %p170 = scmp.lt.s32.totalorder %s16, 2
      // Predicated region
      $region21: #{tpu_custom_call.1} parent=5 // pred_check
        %p171 = pneg %p170
      $region22: #{tpu_custom_call.1} parent=5 // pred_check_branch
        %173 = sbr.rel (%p171) target = $region24
      $region23: #{tpu_custom_call.1} parent=5 // pred_region
        // Predicated region
        $region25: #{tpu_custom_call.1} parent=23 // pred_check
          %p174 = pneg %p48
        $region26: #{tpu_custom_call.1} parent=23 // pred_check_branch
          %176 = sbr.rel (%p174) target = $region28
        $region27: #{tpu_custom_call.1} parent=23 // pred_region
          %s177 = sand.u32 %s38, 1
          %s178 = scalar_lea.sflag [#allocation3], %s177
          %s179 = sand.u32 %s38, 1
          %s180 = smul.addr %s179, 128
          %s181 = scalar_lea.vmem [#allocation2], %s180
          %s182 = smul.u32 32, %s23
          %s184 = ssub.s32 2048, 2048
          %185 = vsyncadd %s178, %s184
          %s186 = smul.addr %s182, 64
          %s187 = scalar_lea.hbm %s0, %s186
          %s188 = sshll.u32 %s181, 4
          %s189 = int_to_ptr.vmem [resolvable:$true] %s188
          %194 = dma.hbm_to_vmem [thread:$0]  %s187, 2048, %s189, %s178, 64, 64, 4
        $region28: #{tpu_custom_call.1} parent=23 // pred_fallthru
          _
      $region24: #{tpu_custom_call.1} parent=5 // pred_fallthru
        _
      %p195 = scmp.le.s32.totalorder 1, %s16
      %p196 = scmp.lt.s32.totalorder %s16, 3
      %p197 = pnand %p195, %p196
      %p198 = pneg %p197
      // Predicated region
      $region29: #{tpu_custom_call.1} parent=5 // pred_check
        _
      $region30: #{tpu_custom_call.1} parent=5 // pred_check_branch
        %200 = sbr.rel (%p197) target = $region32
      $region31: #{tpu_custom_call.1} parent=5 // pred_region
        %s201 = ssub.s32 %s16, 1
        %s202 = sand.u32 %s41, 1
        %s203 = scalar_lea.sflag [#allocation3], %s202
        %s204 = sand.u32 %s41, 1
        %s205 = smul.addr %s204, 128
        %s206 = scalar_lea.vmem [#allocation2], %s205
        // Predicated region
        $region33: #{tpu_custom_call.1} parent=31 // pred_check
          %p207 = pneg %p54
        $region34: #{tpu_custom_call.1} parent=31 // pred_check_branch
          %209 = sbr.rel (%p207) target = $region36
        $region35: #{tpu_custom_call.1} parent=31 // pred_region
          %210 = dma.done %s203, 2048
        $region36: #{tpu_custom_call.1} parent=31 // pred_fallthru
          _
        // Predicated region
        $region37: #{tpu_custom_call.1} parent=31 // pred_check
          %p211 = pneg %p80
        $region38: #{tpu_custom_call.1} parent=31 // pred_check_branch
          %213 = sbr.rel (%p211) target = $region40
        $region39: #{tpu_custom_call.1} parent=31 // pred_region
          %214 = dma.done [#allocation6], 1024
        $region40: #{tpu_custom_call.1} parent=31 // pred_fallthru
          _
        %s215 = sand.u32 %s41, 1
        %s216 = scalar_lea.sflag [#allocation3], %s215
        %s217 = sand.u32 %s41, 1
        %s218 = smul.addr %s217, 128
        %s219 = scalar_lea.vmem [#allocation2], %s218
        %p220 = pneg %p54
        %p221 = pneg %p51
        %p222 = pneg %p80
        %p223 = pneg %p77
        %p224 = scmp.lt.s32.totalorder %s26, 0
        %s225 = scalar_select %p224, %s26, 0
        %s226 = scalar_lea.vmem %s2, %s225
        %p227 = pneg %p106
        %p228 = pneg %p103
        %p229 = pneg %p134
        %p230 = pneg %p131
        %s231 = sand.u32 %s121, 1
        %s232 = scalar_lea.sflag [#allocation4], %s231
        %s233 = sand.u32 %s121, 1
        %s234 = smul.addr %s233, 128
        %s235 = scalar_lea.vmem [#allocation7], %s234
        %s236 = smul.u32 32, %s25
        %p237 = scmp.lt.s32.totalorder %s26, 0
        %s238 = scalar_select %p237, %s26, 0
        %s239 = scalar_lea.vmem %s2, %s238
        %s240 = smul.u32 32, %s25
        %v242 = vld [vmem:[%s206] sm:$0xf]
        %v243 = vld [vmem:[%s206 + $0x4] sm:$0xf]
        %v244 = vld [vmem:[%s206 + $0x8] sm:$0xf]
        %v245 = vld [vmem:[%s206 + $0xc] sm:$0xf]
        %v246 = vld [vmem:[%s206 + $0x10] sm:$0xf]
        %v247 = vld [vmem:[%s206 + $0x14] sm:$0xf]
        %v248 = vld [vmem:[%s206 + $0x18] sm:$0xf]
        %v249 = vld [vmem:[%s206 + $0x1c] sm:$0xf]
        %v250 = vld [vmem:[%s206 + $0x20] sm:$0xf]
        %v251 = vld [vmem:[%s206 + $0x24] sm:$0xf]
        %v252 = vld [vmem:[%s206 + $0x28] sm:$0xf]
        %v253 = vld [vmem:[%s206 + $0x2c] sm:$0xf]
        %v254 = vld [vmem:[%s206 + $0x30] sm:$0xf]
        %v255 = vld [vmem:[%s206 + $0x34] sm:$0xf]
        %v256 = vld [vmem:[%s206 + $0x38] sm:$0xf]
        %v257 = vld [vmem:[%s206 + $0x3c] sm:$0xf]
        %v258 = vld [vmem:[%s206 + $0x40] sm:$0xf]
        %v259 = vld [vmem:[%s206 + $0x44] sm:$0xf]
        %v260 = vld [vmem:[%s206 + $0x48] sm:$0xf]
        %v261 = vld [vmem:[%s206 + $0x4c] sm:$0xf]
        %v262 = vld [vmem:[%s206 + $0x50] sm:$0xf]
        %v263 = vld [vmem:[%s206 + $0x54] sm:$0xf]
        %v264 = vld [vmem:[%s206 + $0x58] sm:$0xf]
        %v265 = vld [vmem:[%s206 + $0x5c] sm:$0xf]
        %v266 = vld [vmem:[%s206 + $0x60] sm:$0xf]
        %v267 = vld [vmem:[%s206 + $0x64] sm:$0xf]
        %v268 = vld [vmem:[%s206 + $0x68] sm:$0xf]
        %v269 = vld [vmem:[%s206 + $0x6c] sm:$0xf]
        %v270 = vld [vmem:[%s206 + $0x70] sm:$0xf]
        %v271 = vld [vmem:[%s206 + $0x74] sm:$0xf]
        %v272 = vld [vmem:[%s206 + $0x78] sm:$0xf]
        %v273 = vld [vmem:[%s206 + $0x7c] sm:$0xf]
        %v274 = vld [vmem:[#allocation5] sm:$0xf]
        %v275 = vld [vmem:[#allocation5 + $0x4] sm:$0xf]
        %v276 = vld [vmem:[#allocation5 + $0x8] sm:$0xf]
        %v277 = vld [vmem:[#allocation5 + $0xc] sm:$0xf]
        %v278 = vld [vmem:[#allocation5 + $0x10] sm:$0xf]
        %v279 = vld [vmem:[#allocation5 + $0x14] sm:$0xf]
        %v280 = vld [vmem:[#allocation5 + $0x18] sm:$0xf]
        %v281 = vld [vmem:[#allocation5 + $0x1c] sm:$0xf]
        %v282 = vld [vmem:[#allocation5 + $0x20] sm:$0xf]
        %v283 = vld [vmem:[#allocation5 + $0x24] sm:$0xf]
        %v284 = vld [vmem:[#allocation5 + $0x28] sm:$0xf]
        %v285 = vld [vmem:[#allocation5 + $0x2c] sm:$0xf]
        %v286 = vld [vmem:[#allocation5 + $0x30] sm:$0xf]
        %v287 = vld [vmem:[#allocation5 + $0x34] sm:$0xf]
        %v288 = vld [vmem:[#allocation5 + $0x38] sm:$0xf]
        %v289 = vld [vmem:[#allocation5 + $0x3c] sm:$0xf]
        %v290 = vld [vmem:[%s239] sm:$0x1]
        %v292 = vlaneseq
        %v293 = vshrl.u32 %v292, 7
        %v294 = vsub.s32 0, %v293
        %v295 = vrot.slane %v290, %v294
        %v329 = vunpack.c.l.b16 %v242
        %v330 = vunpack.c.l.b16 %v243
        %v331 = vunpack.c.l.b16 %v244
        %v332 = vunpack.c.l.b16 %v245
        %v333 = vunpack.c.l.b16 %v246
        %v334 = vunpack.c.l.b16 %v247
        %v335 = vunpack.c.l.b16 %v248
        %v336 = vunpack.c.l.b16 %v249
        %v337 = vunpack.c.l.b16 %v250
        %v338 = vunpack.c.l.b16 %v251
        %v339 = vunpack.c.l.b16 %v252
        %v340 = vunpack.c.l.b16 %v253
        %v341 = vunpack.c.l.b16 %v254
        %v342 = vunpack.c.l.b16 %v255
        %v343 = vunpack.c.l.b16 %v256
        %v344 = vunpack.c.l.b16 %v257
        %v345 = vunpack.c.l.b16 %v258
        %v346 = vunpack.c.l.b16 %v259
        %v347 = vunpack.c.l.b16 %v260
        %v348 = vunpack.c.l.b16 %v261
        %v349 = vunpack.c.l.b16 %v262
        %v350 = vunpack.c.l.b16 %v263
        %v351 = vunpack.c.l.b16 %v264
        %v352 = vunpack.c.l.b16 %v265
        %v353 = vunpack.c.l.b16 %v266
        %v354 = vunpack.c.l.b16 %v267
        %v355 = vunpack.c.l.b16 %v268
        %v356 = vunpack.c.l.b16 %v269
        %v357 = vunpack.c.l.b16 %v270
        %v358 = vunpack.c.l.b16 %v271
        %v359 = vunpack.c.l.b16 %v272
        %v360 = vunpack.c.l.b16 %v273
        %v361 = vpack.c.b16 %v330, %v329
        %v362 = vpack.c.b16 %v332, %v331
        %v363 = vpack.c.b16 %v334, %v333
        %v364 = vpack.c.b16 %v336, %v335
        %v365 = vpack.c.b16 %v338, %v337
        %v366 = vpack.c.b16 %v340, %v339
        %v367 = vpack.c.b16 %v342, %v341
        %v368 = vpack.c.b16 %v344, %v343
        %v369 = vpack.c.b16 %v346, %v345
        %v370 = vpack.c.b16 %v348, %v347
        %v371 = vpack.c.b16 %v350, %v349
        %v372 = vpack.c.b16 %v352, %v351
        %v373 = vpack.c.b16 %v354, %v353
        %v374 = vpack.c.b16 %v356, %v355
        %v375 = vpack.c.b16 %v358, %v357
        %v376 = vpack.c.b16 %v360, %v359
        %v409 = vunpack.c.l.b16 %v274
        %v410 = vunpack.c.l.b16 %v275
        %v411 = vunpack.c.l.b16 %v276
        %v412 = vunpack.c.l.b16 %v277
        %v413 = vunpack.c.l.b16 %v278
        %v414 = vunpack.c.l.b16 %v279
        %v415 = vunpack.c.l.b16 %v280
        %v416 = vunpack.c.l.b16 %v281
        %v417 = vunpack.c.l.b16 %v282
        %v418 = vunpack.c.l.b16 %v283
        %v419 = vunpack.c.l.b16 %v284
        %v420 = vunpack.c.l.b16 %v285
        %v421 = vunpack.c.l.b16 %v286
        %v422 = vunpack.c.l.b16 %v287
        %v423 = vunpack.c.l.b16 %v288
        %v424 = vunpack.c.l.b16 %v289
        %v425 = vpack.c.b16 %v410, %v409
        %v426 = vpack.c.b16 %v412, %v411
        %v427 = vpack.c.b16 %v414, %v413
        %v428 = vpack.c.b16 %v416, %v415
        %v429 = vpack.c.b16 %v418, %v417
        %v430 = vpack.c.b16 %v420, %v419
        %v431 = vpack.c.b16 %v422, %v421
        %v432 = vpack.c.b16 %v424, %v423
        %441 = vmatprep.subr.bf16.mxu0 0
        %442 = vmatpush1.bf16.msra.mxu0 %v432
        %443 = vmatprep.subr.bf16.mxu0 0
        %444 = vmatpush1.bf16.msra.mxu0 %v431
        %445 = vmatprep.subr.bf16.mxu0 0
        %446 = vmatpush1.bf16.msra.mxu0 %v430
        %447 = vmatprep.subr.bf16.mxu0 0
        %448 = vmatpush1.bf16.msra.mxu0 %v429
        %449 = vmatprep.subr.bf16.mxu0 0
        %450 = vmatpush1.bf16.msra.mxu0 %v428
        %451 = vmatprep.subr.bf16.mxu0 0
        %452 = vmatpush1.bf16.msra.mxu0 %v427
        %453 = vmatprep.subr.bf16.mxu0 0
        %454 = vmatpush1.bf16.msra.mxu0 %v426
        %455 = vmatprep.subr.bf16.mxu0 0
        %456 = vmatpush1.bf16.msra.mxu0 %v425
        %457 = vmatprep.subr.bf16.mxu0 0
        %458 = vmatpush2.bf16.msra.mxu0 0
        %459 = vmatprep.subr.bf16.mxu0 0
        %460 = vmatpush2.bf16.msra.mxu0 0
        %461 = vmatprep.subr.bf16.mxu0 0
        %462 = vmatpush2.bf16.msra.mxu0 0
        %463 = vmatprep.subr.bf16.mxu0 0
        %464 = vmatpush2.bf16.msra.mxu0 0
        %465 = vmatprep.subr.bf16.mxu0 0
        %466 = vmatpush2.bf16.msra.mxu0 0
        %467 = vmatprep.subr.bf16.mxu0 0
        %468 = vmatpush2.bf16.msra.mxu0 0
        %469 = vmatprep.subr.bf16.mxu0 0
        %470 = vmatpush2.bf16.msra.mxu0 0
        %471 = vmatprep.subr.bf16.mxu0 0
        %472 = vmatpush2.bf16.msra.mxu0 0
        %473 = vmatprep.mubr.bf16.mxu0 0
        %474 = vmatmul.mubr.bf16.gmra.mxu0 %v361
        %v475 = vpop.f32.mrf.mxu0
        %v476 = vadd.f32 %v295, %v475
        %v477 = vpop.f32.mrf.mxu0
        %v478 = vpop.f32.mrf.mxu0
        %v479 = vadd.f32 %v295, %v478
        %v480 = vpop.f32.mrf.mxu0
        %481 = vmatprep.mubr.bf16.mxu0 0
        %482 = vmatmul.mubr.bf16.gmra.mxu0 %v362
        %v483 = vpop.f32.mrf.mxu0
        %v484 = vadd.f32 %v295, %v483
        %v485 = vpop.f32.mrf.mxu0
        %v486 = vpop.f32.mrf.mxu0
        %v487 = vadd.f32 %v295, %v486
        %v488 = vpop.f32.mrf.mxu0
        %489 = vmatprep.mubr.bf16.mxu0 0
        %490 = vmatmul.mubr.bf16.gmra.mxu0 %v363
        %v491 = vpop.f32.mrf.mxu0
        %v492 = vadd.f32 %v295, %v491
        %v493 = vpop.f32.mrf.mxu0
        %v494 = vpop.f32.mrf.mxu0
        %v495 = vadd.f32 %v295, %v494
        %v496 = vpop.f32.mrf.mxu0
        %497 = vmatprep.mubr.bf16.mxu0 0
        %498 = vmatmul.mubr.bf16.gmra.mxu0 %v364
        %v499 = vpop.f32.mrf.mxu0
        %v500 = vadd.f32 %v295, %v499
        %v501 = vpop.f32.mrf.mxu0
        %v502 = vpop.f32.mrf.mxu0
        %v503 = vadd.f32 %v295, %v502
        %v504 = vpop.f32.mrf.mxu0
        %505 = vmatprep.mubr.bf16.mxu0 0
        %506 = vmatmul.mubr.bf16.gmra.mxu0 %v365
        %v507 = vpop.f32.mrf.mxu0
        %v508 = vadd.f32 %v295, %v507
        %v509 = vpop.f32.mrf.mxu0
        %v510 = vpop.f32.mrf.mxu0
        %v511 = vadd.f32 %v295, %v510
        %v512 = vpop.f32.mrf.mxu0
        %513 = vmatprep.mubr.bf16.mxu0 0
        %514 = vmatmul.mubr.bf16.gmra.mxu0 %v366
        %v515 = vpop.f32.mrf.mxu0
        %v516 = vadd.f32 %v295, %v515
        %v517 = vpop.f32.mrf.mxu0
        %v518 = vpop.f32.mrf.mxu0
        %v519 = vadd.f32 %v295, %v518
        %v520 = vpop.f32.mrf.mxu0
        %521 = vmatprep.mubr.bf16.mxu0 0
        %522 = vmatmul.mubr.bf16.gmra.mxu0 %v367
        %v523 = vpop.f32.mrf.mxu0
        %v524 = vadd.f32 %v295, %v523
        %v525 = vpop.f32.mrf.mxu0
        %v526 = vpop.f32.mrf.mxu0
        %v527 = vadd.f32 %v295, %v526
        %v528 = vpop.f32.mrf.mxu0
        %529 = vmatprep.mubr.bf16.mxu0 0
        %530 = vmatmul.mubr.bf16.gmra.mxu0 %v368
        %v531 = vpop.f32.mrf.mxu0
        %v532 = vadd.f32 %v295, %v531
        %v533 = vpop.f32.mrf.mxu0
        %v534 = vpop.f32.mrf.mxu0
        %v535 = vadd.f32 %v295, %v534
        %v536 = vpop.f32.mrf.mxu0
        %537 = vmatprep.mubr.bf16.mxu0 0
        %538 = vmatmul.mubr.bf16.gmra.mxu0 %v369
        %v539 = vpop.f32.mrf.mxu0
        %v540 = vadd.f32 %v295, %v539
        %v541 = vpop.f32.mrf.mxu0
        %v542 = vpop.f32.mrf.mxu0
        %v543 = vadd.f32 %v295, %v542
        %v544 = vpop.f32.mrf.mxu0
        %545 = vmatprep.mubr.bf16.mxu0 0
        %546 = vmatmul.mubr.bf16.gmra.mxu0 %v370
        %v547 = vpop.f32.mrf.mxu0
        %v548 = vadd.f32 %v295, %v547
        %v549 = vpop.f32.mrf.mxu0
        %v550 = vpop.f32.mrf.mxu0
        %v551 = vadd.f32 %v295, %v550
        %v552 = vpop.f32.mrf.mxu0
        %553 = vmatprep.mubr.bf16.mxu0 0
        %554 = vmatmul.mubr.bf16.gmra.mxu0 %v371
        %v555 = vpop.f32.mrf.mxu0
        %v556 = vadd.f32 %v295, %v555
        %v557 = vpop.f32.mrf.mxu0
        %v558 = vpop.f32.mrf.mxu0
        %v559 = vadd.f32 %v295, %v558
        %v560 = vpop.f32.mrf.mxu0
        %561 = vmatprep.mubr.bf16.mxu0 0
        %562 = vmatmul.mubr.bf16.gmra.mxu0 %v372
        %v563 = vpop.f32.mrf.mxu0
        %v564 = vadd.f32 %v295, %v563
        %v565 = vpop.f32.mrf.mxu0
        %v566 = vpop.f32.mrf.mxu0
        %v567 = vadd.f32 %v295, %v566
        %v568 = vpop.f32.mrf.mxu0
        %569 = vmatprep.mubr.bf16.mxu0 0
        %570 = vmatmul.mubr.bf16.gmra.mxu0 %v373
        %v571 = vpop.f32.mrf.mxu0
        %v572 = vadd.f32 %v295, %v571
        %v573 = vpop.f32.mrf.mxu0
        %v574 = vpop.f32.mrf.mxu0
        %v575 = vadd.f32 %v295, %v574
        %v576 = vpop.f32.mrf.mxu0
        %577 = vmatprep.mubr.bf16.mxu0 0
        %578 = vmatmul.mubr.bf16.gmra.mxu0 %v374
        %v579 = vpop.f32.mrf.mxu0
        %v580 = vadd.f32 %v295, %v579
        %v581 = vpop.f32.mrf.mxu0
        %v582 = vpop.f32.mrf.mxu0
        %v583 = vadd.f32 %v295, %v582
        %v584 = vpop.f32.mrf.mxu0
        %585 = vmatprep.mubr.bf16.mxu0 0
        %586 = vmatmul.mubr.bf16.gmra.mxu0 %v375
        %v587 = vpop.f32.mrf.mxu0
        %v588 = vadd.f32 %v295, %v587
        %v589 = vpop.f32.mrf.mxu0
        %v590 = vpop.f32.mrf.mxu0
        %v591 = vadd.f32 %v295, %v590
        %v592 = vpop.f32.mrf.mxu0
        %593 = vmatprep.mubr.bf16.mxu0 0
        %594 = vmatmul.mubr.bf16.gmra.mxu0 %v376
        %v595 = vpop.f32.mrf.mxu0
        %v596 = vadd.f32 %v295, %v595
        %v597 = vpop.f32.mrf.mxu0
        %v598 = vpop.f32.mrf.mxu0
        %v599 = vadd.f32 %v295, %v598
        %v600 = vpop.f32.mrf.mxu0
        %601 = vdwg.mxu0
        %v602 = vpack.c.bf16 %v479, %v476
        %v603 = vpack.c.bf16 %v487, %v484
        %v604 = vpack.c.bf16 %v495, %v492
        %v605 = vpack.c.bf16 %v503, %v500
        %v606 = vpack.c.bf16 %v511, %v508
        %v607 = vpack.c.bf16 %v519, %v516
        %v608 = vpack.c.bf16 %v527, %v524
        %v609 = vpack.c.bf16 %v535, %v532
        %v610 = vpack.c.bf16 %v543, %v540
        %v611 = vpack.c.bf16 %v551, %v548
        %v612 = vpack.c.bf16 %v559, %v556
        %v613 = vpack.c.bf16 %v567, %v564
        %v614 = vpack.c.bf16 %v575, %v572
        %v615 = vpack.c.bf16 %v583, %v580
        %v616 = vpack.c.bf16 %v591, %v588
        %v617 = vpack.c.bf16 %v599, %v596
        %v634 = vunpack.c.l.b16 %v602
        %v635 = vunpack.c.h.b16 %v602
        %v636 = vunpack.c.l.b16 %v603
        %v637 = vunpack.c.h.b16 %v603
        %v638 = vunpack.c.l.b16 %v604
        %v639 = vunpack.c.h.b16 %v604
        %v640 = vunpack.c.l.b16 %v605
        %v641 = vunpack.c.h.b16 %v605
        %v642 = vunpack.c.l.b16 %v606
        %v643 = vunpack.c.h.b16 %v606
        %v644 = vunpack.c.l.b16 %v607
        %v645 = vunpack.c.h.b16 %v607
        %v646 = vunpack.c.l.b16 %v608
        %v647 = vunpack.c.h.b16 %v608
        %v648 = vunpack.c.l.b16 %v609
        %v649 = vunpack.c.h.b16 %v609
        %v650 = vunpack.c.l.b16 %v610
        %v651 = vunpack.c.h.b16 %v610
        %v652 = vunpack.c.l.b16 %v611
        %v653 = vunpack.c.h.b16 %v611
        %v654 = vunpack.c.l.b16 %v612
        %v655 = vunpack.c.h.b16 %v612
        %v656 = vunpack.c.l.b16 %v613
        %v657 = vunpack.c.h.b16 %v613
        %v658 = vunpack.c.l.b16 %v614
        %v659 = vunpack.c.h.b16 %v614
        %v660 = vunpack.c.l.b16 %v615
        %v661 = vunpack.c.h.b16 %v615
        %v662 = vunpack.c.l.b16 %v616
        %v663 = vunpack.c.h.b16 %v616
        %v664 = vunpack.c.l.b16 %v617
        %v665 = vunpack.c.h.b16 %v617
        %v666 = vpack.c.b16 %v634, %v634
        %v667 = vpack.c.b16 %v635, %v635
        %v668 = vpack.c.b16 %v636, %v636
        %v669 = vpack.c.b16 %v637, %v637
        %v670 = vpack.c.b16 %v638, %v638
        %v671 = vpack.c.b16 %v639, %v639
        %v672 = vpack.c.b16 %v640, %v640
        %v673 = vpack.c.b16 %v641, %v641
        %v674 = vpack.c.b16 %v642, %v642
        %v675 = vpack.c.b16 %v643, %v643
        %v676 = vpack.c.b16 %v644, %v644
        %v677 = vpack.c.b16 %v645, %v645
        %v678 = vpack.c.b16 %v646, %v646
        %v679 = vpack.c.b16 %v647, %v647
        %v680 = vpack.c.b16 %v648, %v648
        %v681 = vpack.c.b16 %v649, %v649
        %v682 = vpack.c.b16 %v650, %v650
        %v683 = vpack.c.b16 %v651, %v651
        %v684 = vpack.c.b16 %v652, %v652
        %v685 = vpack.c.b16 %v653, %v653
        %v686 = vpack.c.b16 %v654, %v654
        %v687 = vpack.c.b16 %v655, %v655
        %v688 = vpack.c.b16 %v656, %v656
        %v689 = vpack.c.b16 %v657, %v657
        %v690 = vpack.c.b16 %v658, %v658
        %v691 = vpack.c.b16 %v659, %v659
        %v692 = vpack.c.b16 %v660, %v660
        %v693 = vpack.c.b16 %v661, %v661
        %v694 = vpack.c.b16 %v662, %v662
        %v695 = vpack.c.b16 %v663, %v663
        %v696 = vpack.c.b16 %v664, %v664
        %v697 = vpack.c.b16 %v665, %v665
        %730 = vst [vmem:[%s235] sm:$0xf] %v666
        %731 = vst [vmem:[%s235 + $0x4] sm:$0xf] %v667
        %732 = vst [vmem:[%s235 + $0x8] sm:$0xf] %v668
        %733 = vst [vmem:[%s235 + $0xc] sm:$0xf] %v669
        %734 = vst [vmem:[%s235 + $0x10] sm:$0xf] %v670
        %735 = vst [vmem:[%s235 + $0x14] sm:$0xf] %v671
        %736 = vst [vmem:[%s235 + $0x18] sm:$0xf] %v672
        %737 = vst [vmem:[%s235 + $0x1c] sm:$0xf] %v673
        %738 = vst [vmem:[%s235 + $0x20] sm:$0xf] %v674
        %739 = vst [vmem:[%s235 + $0x24] sm:$0xf] %v675
        %740 = vst [vmem:[%s235 + $0x28] sm:$0xf] %v676
        %741 = vst [vmem:[%s235 + $0x2c] sm:$0xf] %v677
        %742 = vst [vmem:[%s235 + $0x30] sm:$0xf] %v678
        %743 = vst [vmem:[%s235 + $0x34] sm:$0xf] %v679
        %744 = vst [vmem:[%s235 + $0x38] sm:$0xf] %v680
        %745 = vst [vmem:[%s235 + $0x3c] sm:$0xf] %v681
        %746 = vst [vmem:[%s235 + $0x40] sm:$0xf] %v682
        %747 = vst [vmem:[%s235 + $0x44] sm:$0xf] %v683
        %748 = vst [vmem:[%s235 + $0x48] sm:$0xf] %v684
        %749 = vst [vmem:[%s235 + $0x4c] sm:$0xf] %v685
        %750 = vst [vmem:[%s235 + $0x50] sm:$0xf] %v686
        %751 = vst [vmem:[%s235 + $0x54] sm:$0xf] %v687
        %752 = vst [vmem:[%s235 + $0x58] sm:$0xf] %v688
        %753 = vst [vmem:[%s235 + $0x5c] sm:$0xf] %v689
        %754 = vst [vmem:[%s235 + $0x60] sm:$0xf] %v690
        %755 = vst [vmem:[%s235 + $0x64] sm:$0xf] %v691
        %756 = vst [vmem:[%s235 + $0x68] sm:$0xf] %v692
        %757 = vst [vmem:[%s235 + $0x6c] sm:$0xf] %v693
        %758 = vst [vmem:[%s235 + $0x70] sm:$0xf] %v694
        %759 = vst [vmem:[%s235 + $0x74] sm:$0xf] %v695
        %760 = vst [vmem:[%s235 + $0x78] sm:$0xf] %v696
        %761 = vst [vmem:[%s235 + $0x7c] sm:$0xf] %v697
        %s762 = sand.u32 %s121, 1
        %s763 = scalar_lea.sflag [#allocation4], %s762
        %s764 = sand.u32 %s121, 1
        %s765 = smul.addr %s764, 128
        %s766 = scalar_lea.vmem [#allocation7], %s765
        // Predicated region
        $region41: #{tpu_custom_call.1} parent=31 // pred_check
          %p767 = pneg %p131
        $region42: #{tpu_custom_call.1} parent=31 // pred_check_branch
          %769 = sbr.rel (%p767) target = $region44
        $region43: #{tpu_custom_call.1} parent=31 // pred_region
          %s770 = smul.u32 32, %s25
          %s772 = ssub.s32 2048, 2048
          %773 = vsyncadd %s763, %s772
          %s774 = sadd.s32 %s26, %s770
          %s775 = smul.addr %s774, 64
          %s776 = scalar_lea.hbm %s3, %s775
          %s777 = sshll.u32 %s766, 4
          %s778 = int_to_ptr.vmem [resolvable:$true] %s777
          %783 = dma.vmem_to_hbm [thread:$0]  %s778, 2048, %s776, %s763, 64, 64, 4
        $region44: #{tpu_custom_call.1} parent=31 // pred_fallthru
          _
      $region32: #{tpu_custom_call.1} parent=5 // pred_fallthru
        _
      %p784 = scmp.le.s32.totalorder 2, %s16
      // Predicated region
      $region45: #{tpu_custom_call.1} parent=5 // pred_check
        %p785 = pneg %p784
      $region46: #{tpu_custom_call.1} parent=5 // pred_check_branch
        %787 = sbr.rel (%p785) target = $region48
      $region47: #{tpu_custom_call.1} parent=5 // pred_region
        %s788 = ssub.s32 %s16, 2
        // Predicated region
        $region49: #{tpu_custom_call.1} parent=47 // pred_check
          %p789 = pneg %p137
        $region50: #{tpu_custom_call.1} parent=47 // pred_check_branch
          %791 = sbr.rel (%p789) target = $region52
        $region51: #{tpu_custom_call.1} parent=47 // pred_region
          %s792 = sand.u32 %s122, 1
          %s793 = scalar_lea.sflag [#allocation4], %s792
          %s794 = sand.u32 %s122, 1
          %s795 = smul.addr %s794, 128
          %s796 = scalar_lea.vmem [#allocation7], %s795
          %797 = dma.done %s793, 2048
        $region52: #{tpu_custom_call.1} parent=47 // pred_fallthru
          _
      $region48: #{tpu_custom_call.1} parent=5 // pred_fallthru
        _
    $region6: #{tpu_custom_call.1} parent=1 // loop_footer
      %s20 = sadd.s32 1, %s16
    $region7: #{tpu_custom_call.1} parent=1 // loop_footer_branch
      %15 = sbr.rel target = $region3
    $region8: #{tpu_custom_call.1} parent=1 // loop_exit
      _
    %798 = vsyncpa [#allocation3], 1
    %s799 = scalar_lea.sflag [#allocation3], 1
    %800 = vsyncpa %s799, 1
    %801 = vsyncpa [#allocation6], 1
    %802 = vsyncpa [#allocation4], 1
    %s803 = scalar_lea.sflag [#allocation4], 1
    %804 = vsyncpa %s803, 1

</llo_original>
